<compile_context>
chip_gen: v7x
topology: tpu7x:2x2x1
jax: 0.10.0
libtpu: 0.0.40
codegen_flags: <defaults>
</compile_context>

<pallas_src>
import functools
import math

import jax
import jax.numpy as jnp
from jax.experimental import pallas as pl
from jax.experimental.pallas import tpu as pltpu


# --------------------------------------------------------------------------
# Generation-aware VMEM plan: (budget_bytes, tn_hard_cap, is_multicore_chip)
# --------------------------------------------------------------------------
def _device_vmem_plan():
    kind = ""
    try:
        kind = jax.devices()[0].device_kind.lower()
    except Exception:
        pass
    is_v7 = ("v7" in kind) or ("tpu7" in kind) or ("tpu 7" in kind)
    if "v5" in kind:
        # v5e: 128 MiB physical / 16 MiB scoped default, 1 vst slot, most
        # HBM-bound -> keep tiles moderate, rely on the fused accum chain.
        return 12 << 20, 32768, False
    if is_v7:
        # v7x: only 64 MiB physical VMEM per TC (32 MiB scoped default),
        # but 2 TensorCores per chip.
        return 20 << 20, 65536, True
    # v6e (and unknown): 128 MiB physical / 32 MiB scoped default.
    return 24 << 20, 65536, False


# --------------------------------------------------------------------------
# Main CRPS kernel: one pixel tile -> one partial score.
# --------------------------------------------------------------------------
def _crps_kernel(f_ref, o_ref, out_ref, *, m):
    # f_ref: (M, TN)  members on sublanes, pixels on lanes.
    # o_ref: (1, TN)  observations (sublane-broadcast against f).
    # out_ref: (1, 128) per-tile partial score (scalar splatted across lanes).
    f = f_ref[...]
    o = o_ref[...]

    # term 1: sum_{members,pixels} |f - o|   (native-dtype abs, f32 reduce)
    term1 = jnp.sum(jnp.abs(f - o), dtype=jnp.float32)
    score = term1 * (1.0 / m)

    # term 2: ordered-pair spread via circular sublane rolls.
    #   S_s = sum_i |f_i - f_{(i+s)%M}|,  S_s == S_{M-s}
    # One f32 vector accumulator, a single jnp.sum at the end (no per-shift
    # scalar reductions -> one XLU reduce, fused VALU chain per shift).
    if m > 1:
        acc = jnp.zeros(f.shape, dtype=jnp.float32)
        for s in range(1, (m - 1) // 2 + 1):
            acc = acc + jnp.abs(f - pltpu.roll(f, shift=s, axis=0))
        if m % 2 == 0:
            acc = acc + 0.5 * jnp.abs(
                f - pltpu.roll(f, shift=m // 2, axis=0)).astype(jnp.float32)
        spread = 2.0 * jnp.sum(acc)
        score = score - spread * (0.5 / (m * m))

    # Plain unmasked lane-dense store: splat the scalar across the block.
    out_ref[...] = jnp.broadcast_to(score.astype(jnp.float32), out_ref.shape)


# --------------------------------------------------------------------------
# Secondary branch (obs.ndim == forecasts.ndim): tiled elementwise |o - f|.
# --------------------------------------------------------------------------
def _abs_diff_kernel(a_ref, b_ref, o_ref):
    o_ref[...] = jnp.abs(a_ref[...] - b_ref[...])


def _abs_diff(o, f):
    shape = jnp.broadcast_shapes(o.shape, f.shape)
    dtype = jnp.result_type(o, f)
    # Skip the broadcast/cast round-trip when shapes/dtypes already match.
    ob = o if (o.shape == shape and o.dtype == dtype) else (
        jnp.broadcast_to(o, shape).astype(dtype))
    fb = f if (f.shape == shape and f.dtype == dtype) else (
        jnp.broadcast_to(f, shape).astype(dtype))

    size = math.prod(shape) if shape else 1
    lanes = 128
    rows = -(-size // lanes)
    tr = min(2048, -(-rows // 8) * 8)          # ~1 MiB f32 block, mult. of 8
    rows_pad = -(-rows // tr) * tr
    pad = rows_pad * lanes - size

    of = ob.reshape(-1)
    ff = fb.reshape(-1)
    if pad:
        of = jnp.pad(of, (0, pad))
        ff = jnp.pad(ff, (0, pad))
    of = of.reshape(rows_pad, lanes)
    ff = ff.reshape(rows_pad, lanes)

    out = pl.pallas_call(
        _abs_diff_kernel,
        out_shape=jax.ShapeDtypeStruct((rows_pad, lanes), dtype),
        grid_spec=pltpu.PrefetchScalarGridSpec(
            num_scalar_prefetch=0,
            grid=(rows_pad // tr,),
            in_specs=[pl.BlockSpec((tr, lanes), lambda i: (i, 0)),
                      pl.BlockSpec((tr, lanes), lambda i: (i, 0))],
            out_specs=pl.BlockSpec((tr, lanes), lambda i: (i, 0))),
        compiler_params=pltpu.CompilerParams(
            dimension_semantics=("parallel",)),
    )(of, ff)
    return out.reshape(-1)[:size].reshape(shape)


# --------------------------------------------------------------------------
# Wrapper mirroring crps_loss.forward.
# --------------------------------------------------------------------------
def crps_loss(observations, forecasts):
    f_sq = jnp.squeeze(forecasts)            # (M, H, W) -- members leading
    o_sq = jnp.squeeze(observations)         # (H, W)

    if o_sq.ndim == f_sq.ndim - 1:
        # Matches PyTorch: obs.shape == permuted_forecasts.shape[:-1]
        assert f_sq.ndim == 3 and o_sq.shape == f_sq.shape[1:]
        m, h, w = f_sq.shape
        n = h * w

        # (M, 1, H, W) -> (M, N): free reshape, no transpose.
        f2 = f_sq.reshape(m, n)
        o2 = o_sq.reshape(1, n)

        itemsize = jnp.dtype(f2.dtype).itemsize
        budget, tn_hard_cap, is_multicore = _device_vmem_plan()

        # Per lane-column footprint: double-buffered inputs + f32 spread
        # accumulator + ~2 live roll/|diff| temporaries.
        bytes_per_col = (2 * (m + 1) * itemsize        # pipelined input bufs
                         + m * 4                        # f32 accumulator
                         + 2 * m * max(itemsize, 4))    # roll + abs temps
        tn_cap = (budget // bytes_per_col) // 128 * 128
        tn_cap = max(128, min(tn_cap, tn_hard_cap))

        n_up = -(-n // 128) * 128
        tn = min(n_up, tn_cap)

        # v7x megacore: ensure the "parallel" pixel grid has >= 2 steps so
        # both TensorCores are used (a 1-step grid idles one core).
        if is_multicore and n_up > 128 and tn >= n_up:
            tn = max(128, (n_up // 2) // 128 * 128)

        # Zero-padded pixels contribute exactly 0 to both terms, so only the
        # final divisor uses the true n.
        n_pad = -(-n // tn) * tn
        if n_pad != n:
            f2 = jnp.pad(f2, ((0, 0), (0, n_pad - n)))
            o2 = jnp.pad(o2, ((0, 0), (0, n_pad - n)))
        grid = n_pad // tn

        partials = pl.pallas_call(
            functools.partial(_crps_kernel, m=m),
            out_shape=jax.ShapeDtypeStruct((grid, 128), jnp.float32),
            grid_spec=pltpu.PrefetchScalarGridSpec(
                num_scalar_prefetch=0,
                grid=(grid,),
                in_specs=[
                    pl.BlockSpec((m, tn), lambda i: (0, i)),
                    pl.BlockSpec((1, tn), lambda i: (0, i)),
                ],
                out_specs=pl.BlockSpec((1, 128), lambda i: (i, 0)),
            ),
            compiler_params=pltpu.CompilerParams(
                dimension_semantics=("parallel",),
                vmem_limit_bytes=budget + (8 << 20)),
        )(f2, o2)

        # Each tile splats its partial across 128 lanes; lane 0 is the value.
        return jnp.sum(partials[:, 0]) / n

    elif o_sq.ndim == f_sq.ndim:
        # PyTorch branch returns |obs - permuted_forecasts| (broadcast).
        f_perm = jnp.moveaxis(f_sq, 0, -1) if f_sq.ndim == 3 else f_sq
        return _abs_diff(o_sq, f_perm)

    # PyTorch module returns None implicitly in any other case.
    return None


def crps_ref(observations, forecasts):
    """Plain-JAX reference matching the PyTorch forward."""
    f = jnp.transpose(jnp.squeeze(forecasts), (1, 2, 0))
    o = jnp.squeeze(observations)[..., None]
    score = jnp.mean(jnp.abs(f - o), axis=-1)
    fd = f[..., :, None] - f[..., None, :]
    score = score - 0.5 * jnp.mean(jnp.abs(fd), axis=(-2, -1))
    return jnp.mean(score)


if __name__ == "__main__":
    key = jax.random.PRNGKey(0)
    k1, k2 = jax.random.split(key)
    M, H, W = 8, 16, 16
    observations = jax.random.normal(k1, (1, H, W), dtype=jnp.float32)
    forecasts = jax.random.normal(k2, (M, 1, H, W), dtype=jnp.float32)

    out = crps_loss(observations, forecasts)
    jax.block_until_ready(out)

    ref = crps_ref(observations, forecasts)
    assert jnp.allclose(out, ref, atol=1e-5, rtol=1e-5), (out, ref)
    print("KERNEL_OK")
</pallas_src>

<mosaic_0001>
module attributes {stable_mosaic.version = 11 : i64} {
  func.func @_crps_kernel(%arg0: i32, %arg1: memref<8x256xf32, #tpu.memory_space<vmem>>, %arg2: memref<1x256xf32, #tpu.memory_space<vmem>>, %arg3: memref<1x128xf32, #tpu.memory_space<vmem>>) attributes {dimension_semantics = [#tpu.dimension_semantics<parallel>], iteration_bounds = array<i64: 1>, scalar_prefetch = 0 : i64, scratch_operands = 0 : i64, tpu.core_type = #tpu.core_type<tc>, window_params = [{transform_indices = @transform_0, window_bounds = array<i64: 8, 256>}, {transform_indices = @transform_1, window_bounds = array<i64: 1, 256>}, {transform_indices = @transform_2, window_bounds = array<i64: 1, 128>}]} {
    %c0 = arith.constant 0 : index
    %c0_0 = arith.constant 0 : index
    %0 = vector.load %arg1[%c0, %c0_0] : memref<8x256xf32, #tpu.memory_space<vmem>>, vector<8x256xf32>
    %c0_1 = arith.constant 0 : index
    %c0_2 = arith.constant 0 : index
    %1 = vector.load %arg2[%c0_1, %c0_2] : memref<1x256xf32, #tpu.memory_space<vmem>>, vector<1x256xf32>
    %2 = vector.broadcast %1 : vector<1x256xf32> to vector<8x256xf32>
    %3 = arith.subf %0, %2 : vector<8x256xf32>
    %4 = math.absf %3 : vector<8x256xf32>
    %5 = vector.shape_cast %4 : vector<8x256xf32> to vector<1x8x256xf32>
    %cst = arith.constant dense<0.000000e+00> : vector<1xf32>
    %6 = vector.multi_reduction <add>, %5, %cst [1, 2] : vector<1x8x256xf32> to vector<1xf32>
    %7 = vector.shape_cast %6 : vector<1xf32> to vector<1x1x1xf32>
    %8 = vector.extract %7[0, 0, 0] : f32 from vector<1x1x1xf32>
    %cst_3 = arith.constant 1.250000e-01 : f32
    %9 = arith.mulf %8, %cst_3 : f32
    %cst_4 = arith.constant 0.000000e+00 : f32
    %10 = vector.broadcast %cst_4 : f32 to vector<8x256xf32>
    %c1_i32 = arith.constant 1 : i32
    %11 = tpu.dynamic_rotate %0 by %c1_i32 dim 0 : vector<8x256xf32>, i32 -> vector<8x256xf32>
    %12 = arith.subf %0, %11 : vector<8x256xf32>
    %13 = math.absf %12 : vector<8x256xf32>
    %14 = arith.addf %10, %13 : vector<8x256xf32>
    %c2_i32 = arith.constant 2 : i32
    %15 = tpu.dynamic_rotate %0 by %c2_i32 dim 0 : vector<8x256xf32>, i32 -> vector<8x256xf32>
    %16 = arith.subf %0, %15 : vector<8x256xf32>
    %17 = math.absf %16 : vector<8x256xf32>
    %18 = arith.addf %14, %17 : vector<8x256xf32>
    %c3_i32 = arith.constant 3 : i32
    %19 = tpu.dynamic_rotate %0 by %c3_i32 dim 0 : vector<8x256xf32>, i32 -> vector<8x256xf32>
    %20 = arith.subf %0, %19 : vector<8x256xf32>
    %21 = math.absf %20 : vector<8x256xf32>
    %22 = arith.addf %18, %21 : vector<8x256xf32>
    %c4_i32 = arith.constant 4 : i32
    %23 = tpu.dynamic_rotate %0 by %c4_i32 dim 0 : vector<8x256xf32>, i32 -> vector<8x256xf32>
    %24 = arith.subf %0, %23 : vector<8x256xf32>
    %25 = math.absf %24 : vector<8x256xf32>
    %cst_5 = arith.constant 5.000000e-01 : f32
    %26 = vector.broadcast %cst_5 : f32 to vector<8x256xf32>
    %27 = arith.mulf %26, %25 : vector<8x256xf32>
    %28 = arith.addf %22, %27 : vector<8x256xf32>
    %29 = vector.shape_cast %28 : vector<8x256xf32> to vector<1x8x256xf32>
    %cst_6 = arith.constant dense<0.000000e+00> : vector<1xf32>
    %30 = vector.multi_reduction <add>, %29, %cst_6 [1, 2] : vector<1x8x256xf32> to vector<1xf32>
    %31 = vector.shape_cast %30 : vector<1xf32> to vector<1x1x1xf32>
    %32 = vector.extract %31[0, 0, 0] : f32 from vector<1x1x1xf32>
    %cst_7 = arith.constant 2.000000e+00 : f32
    %33 = arith.mulf %cst_7, %32 : f32
    %cst_8 = arith.constant 7.812500e-03 : f32
    %34 = arith.mulf %33, %cst_8 : f32
    %35 = arith.subf %9, %34 : f32
    %36 = vector.broadcast %35 : f32 to vector<1x128xf32>
    %c0_9 = arith.constant 0 : index
    %c0_10 = arith.constant 0 : index
    %37 = vector.load %arg3[%c0_9, %c0_10] : memref<1x128xf32, #tpu.memory_space<vmem>>, vector<1x128xf32>
    tpu.vector_store %arg3[%c0_9, %c0_10], %36 {strides = array<i32>} : memref<1x128xf32, #tpu.memory_space<vmem>>, vector<1x128xf32>,
    return
  }
  func.func @transform_0(%arg0: i32) -> (i32, i32) {
    %c0_i32 = arith.constant 0 : i32
    %c0_i32_0 = arith.constant 0 : i32
    return %c0_i32, %arg0 : i32, i32
  }
  func.func @transform_1(%arg0: i32) -> (i32, i32) {
    %c0_i32 = arith.constant 0 : i32
    %c0_i32_0 = arith.constant 0 : i32
    return %c0_i32, %arg0 : i32, i32
  }
  func.func @transform_2(%arg0: i32) -> (i32, i32) {
    %c0_i32 = arith.constant 0 : i32
    %c0_i32_0 = arith.constant 0 : i32
    return %arg0, %c0_i32 : i32, i32
  }
}

</mosaic_0001>

<llo_original>
// kernel: tpu_custom_call.1
$region0: #{tpu_custom_call.1}
  #allocation0 [shape = 'u32[]', space=smem, size = 0x4, offset = 0x4, fixed_abs, tag = 'smem constant byte address 0x4 - core index']
  #allocation1 [shape = 'u32[144,128]{1,0:T(1,128)}', space=vmem, size = 0x12000, scoped, tag = 'internal scratch']
  %s0 = inlined_call_operand.hbm [shape: f32[8,256], index: 0, kind: input, shape index: {}]
  %s1 = inlined_call_operand.vmem [shape: f32[1,256], index: 1, kind: input, shape index: {}]
  %s2 = inlined_call_operand.hbm [shape: f32[1,128], index: 2, kind: output, shape index: {}]
  %s3 = sld [smem:[#allocation0]]
  $region22: #{tpu_custom_call.1} parent=0
    _
  %s5 = ssub.s32 1, %s3
  %s6 = scalar_select 0, %s5, %s3
  $region1: #{tpu_custom_call.1} parent=0
    #allocation2 [shape = 'u8[8192]{0}', space=vmem, size = 0x2000, scoped, tag = 'input window, operand 0, single buffered']
    #allocation3 [shape = 's32[1]{0}', space=sflag, size = 0x4, scoped, tag = 'scoped memory for tpu_custom_call.1']
    #allocation4 [shape = 's32[1]{0}', space=sflag, size = 0x4, scoped, tag = 'scoped memory for tpu_custom_call.1']
    #allocation5 [shape = 'u8[512]{0}', space=vmem, size = 0x400, scoped, tag = 'output window, operand 0, single buffered']
    %7 = vsyncpa [#allocation3], 0
    %8 = vsyncpa [#allocation4], 0
    // Predicated region
    $region2: #{tpu_custom_call.1} parent=1 // pred_check
      _
    $region3: #{tpu_custom_call.1} parent=1 // pred_check_branch
      %10 = sbr.rel (0) target = $region5
    $region4: #{tpu_custom_call.1} parent=1 // pred_region
      %s12 = ssub.s32 256, 256
      %13 = vsyncadd [#allocation3], %s12
      %s15 = sshll.u32 [#allocation2], 4
      %s16 = int_to_ptr.vmem [resolvable:$true] %s15
      %18 = dma.hbm_to_vmem [thread:$0]  %s0, 256, %s16, [#allocation3]
    $region5: #{tpu_custom_call.1} parent=1 // pred_fallthru
      _
    // Predicated region
    $region6: #{tpu_custom_call.1} parent=1 // pred_check
      _
    $region7: #{tpu_custom_call.1} parent=1 // pred_check_branch
      %20 = sbr.rel (0) target = $region9
    $region8: #{tpu_custom_call.1} parent=1 // pred_region
      _
    $region9: #{tpu_custom_call.1} parent=1 // pred_fallthru
      _
    // Predicated region
    $region10: #{tpu_custom_call.1} parent=1 // pred_check
      _
    $region11: #{tpu_custom_call.1} parent=1 // pred_check_branch
      %22 = sbr.rel (0) target = $region13
    $region12: #{tpu_custom_call.1} parent=1 // pred_region
      %23 = dma.done [#allocation3], 256
    $region13: #{tpu_custom_call.1} parent=1 // pred_fallthru
      _
    %v24 = vld [vmem:[#allocation2] sm:$0xff]
    %v25 = vld [vmem:[#allocation2 + $0x8] sm:$0xff]
    %v26 = vld [vmem:[%s1] sm:$0x3]
    %v28 = vlaneseq
    %v29 = vshrl.u32 %v28, 7
    %v30 = vsub.s32 0, %v29
    %v31 = vrot.slane %v26, %v30
    %v32 = vlaneseq
    %v33 = vshrl.u32 %v32, 7
    %v34 = vsub.s32 1, %v33
    %v35 = vrot.slane %v26, %v34
    %v38 = vsub.f32 %v24, %v31
    %v39 = vsub.f32 %v25, %v35
    %v40 = vand.u32 2147483647, %v38
    %v41 = vand.u32 2147483647, %v39
    %v42 = vadd.f32 %v40, %v41
    %43 = vadd.xlane.f32.xlu0 %v42
    %v44 = vpop.xlane.xlu0 %43
    %v45 = vrot.slane %v44, 4
    %v46 = vadd.f32 %v44, %v45
    %v47 = vrot.slane %v46, 2
    %v48 = vadd.f32 %v46, %v47
    %v49 = vrot.slane %v48, 1
    %v50 = vadd.f32 %v48, %v49
    %s51 = vtos %v50
    %s52 = smul.f32 %s51, 0.125
    %v53 = vrot.slane %v24, 7
    %v54 = vrot.slane %v25, 7
    %v55 = vsub.f32 %v24, %v53
    %v56 = vsub.f32 %v25, %v54
    %v57 = vand.u32 2147483647, %v55
    %v58 = vand.u32 2147483647, %v56
    %v59 = vadd.f32 %v57, 0.0
    %v60 = vadd.f32 %v58, 0.0
    %v61 = vrot.slane %v24, 6
    %v62 = vrot.slane %v25, 6
    %v63 = vsub.f32 %v24, %v61
    %v64 = vsub.f32 %v25, %v62
    %v65 = vand.u32 2147483647, %v63
    %v66 = vand.u32 2147483647, %v64
    %v67 = vadd.f32 %v59, %v65
    %v68 = vadd.f32 %v60, %v66
    %v69 = vrot.slane %v24, 5
    %v70 = vrot.slane %v25, 5
    %v71 = vsub.f32 %v24, %v69
    %v72 = vsub.f32 %v25, %v70
    %v73 = vand.u32 2147483647, %v71
    %v74 = vand.u32 2147483647, %v72
    %v75 = vadd.f32 %v67, %v73
    %v76 = vadd.f32 %v68, %v74
    %v77 = vrot.slane %v24, 4
    %v78 = vrot.slane %v25, 4
    %v79 = vsub.f32 %v24, %v77
    %v80 = vsub.f32 %v25, %v78
    %v81 = vand.u32 2147483647, %v79
    %v82 = vand.u32 2147483647, %v80
    %v83 = vmul.f32 %v81, 0.5
    %v84 = vmul.f32 %v82, 0.5
    %v85 = vadd.f32 %v75, %v83
    %v86 = vadd.f32 %v76, %v84
    %v87 = vadd.f32 %v85, %v86
    %88 = vadd.xlane.f32.xlu0 %v87
    %v89 = vpop.xlane.xlu0 %88
    %v90 = vrot.slane %v89, 4
    %v91 = vadd.f32 %v89, %v90
    %v92 = vrot.slane %v91, 2
    %v93 = vadd.f32 %v91, %v92
    %v94 = vrot.slane %v93, 1
    %v95 = vadd.f32 %v93, %v94
    %s96 = vtos %v95
    %s97 = smul.f32 %s96, 2.0
    %s98 = smul.f32 %s97, 0.0078125
    %s99 = ssub.f32 %s52, %s98
    %v100 = vstv %s99
    %101 = vst [vmem:[#allocation5] sm:$0x1] %v100
    // Predicated region
    $region14: #{tpu_custom_call.1} parent=1 // pred_check
      _
    $region15: #{tpu_custom_call.1} parent=1 // pred_check_branch
      %103 = sbr.rel (0) target = $region17
    $region16: #{tpu_custom_call.1} parent=1 // pred_region
      %s105 = ssub.s32 16, 16
      %106 = vsyncadd [#allocation4], %s105
      %s108 = sshll.u32 [#allocation5], 4
      %s109 = int_to_ptr.vmem [resolvable:$true] %s108
      %111 = dma.vmem_to_hbm [thread:$0]  %s109, 16, %s2, [#allocation4]
    $region17: #{tpu_custom_call.1} parent=1 // pred_fallthru
      _
    // Predicated region
    $region18: #{tpu_custom_call.1} parent=1 // pred_check
      _
    $region19: #{tpu_custom_call.1} parent=1 // pred_check_branch
      %113 = sbr.rel (0) target = $region21
    $region20: #{tpu_custom_call.1} parent=1 // pred_region
      %114 = dma.done [#allocation4], 16
    $region21: #{tpu_custom_call.1} parent=1 // pred_fallthru
      _
    %115 = vsyncpa [#allocation3], 1
    %116 = vsyncpa [#allocation4], 1

</llo_original>
